<compile_context>
chip_gen: v7x
topology: tpu7x:2x2x1
jax: 0.10.0
libtpu: 0.0.40
codegen_flags: <defaults>
</compile_context>

<pallas_src>
import math

import jax
import jax.numpy as jnp
from jax.experimental import pallas as pl
from jax.experimental.pallas import tpu as pltpu


# ----------------------------------------------------------------------------
# Pallas kernel: fused 3-layer MLP forward, feature-major (batch on lanes).
#   xt : (Din, TB)  f32      w1 : (H, Din) f32      b1 : (H, 1)  f32
#   w2 : (H, H)   bf16       b2 : (H, 1)  f32
#   w3 : (Dout,H) bf16       b3 : (Dout,1) f32      out: (Dout, TB) f32
# ----------------------------------------------------------------------------
def _mlp_kernel(xt_ref, w1_ref, b1_ref, w2_ref, b2_ref, w3_ref, b3_ref, o_ref):
    xt = xt_ref[...]                                   # (Din, TB)  batch on lanes
    w1 = w1_ref[...]                                   # (H, Din)
    din = w1.shape[1]

    # Layer 1 on the VPU: K == Din is tiny (PINN coordinate dims), so two
    # broadcast FMAs instead of an (almost empty) MXU push.  f32 throughout.
    pre1 = w1[:, 0:1] * xt[0:1, :]                     # (H,1)*(1,TB) -> (H,TB)
    for k in range(1, din):                            # static, unrolled
        pre1 = pre1 + w1[:, k : k + 1] * xt[k : k + 1, :]
    h1 = jnp.tanh(pre1 + b1_ref[...])                  # (H, TB) f32

    # Layers 2 & 3 on the MXU: bf16 operands, f32 accumulation, f32 epilogue.
    h2 = jnp.tanh(
        jnp.dot(w2_ref[...], h1.astype(w2_ref.dtype),
                preferred_element_type=jnp.float32)
        + b2_ref[...]
    )                                                  # (H, TB) f32
    out = (
        jnp.dot(w3_ref[...], h2.astype(w3_ref.dtype),
                preferred_element_type=jnp.float32)
        + b3_ref[...]
    )                                                  # (Dout, TB) f32
    o_ref[...] = out.astype(o_ref.dtype)


def _default_num_batch_tiles():
    """2-way parallel grid on dual-TensorCore parts (v7x); 1 step otherwise."""
    try:
        kind = (getattr(jax.devices()[0], "device_kind", "") or "").lower()
        kind = kind.replace(" ", "")
        if "v7" in kind or "tpu7" in kind:
            return 2
    except Exception:
        pass
    return 1


def mlp_forward(x, params, *, num_batch_tiles=None, compute_dtype=jnp.bfloat16):
    """Fused MLP forward with a Pallas kernel; batch rides the 128-lane axis."""
    w1, b1, w2, b2, w3, b3 = params
    B, Din = x.shape
    H = w1.shape[1]
    Dout = w3.shape[1]

    if num_batch_tiles is None:
        num_batch_tiles = _default_num_batch_tiles()

    lane = 128
    groups = pl.cdiv(B, num_batch_tiles * lane)        # lane-groups per tile
    TB = groups * lane                                 # tile width (multiple of 128)
    Bp = TB * num_batch_tiles                          # padded batch

    # Feature-major layout: transpose once in the wrapper (layout plumbing).
    xt = jnp.transpose(x)                              # (Din, B)
    if Bp != B:
        xt = jnp.pad(xt, ((0, 0), (0, Bp - B)))

    w1t = jnp.transpose(w1)                            # (H, Din) f32 (VPU layer 1)
    b1t = jnp.transpose(b1)                            # (H, 1)
    w2t = jnp.transpose(w2).astype(compute_dtype)      # (H, H)   bf16 MXU operand
    b2t = jnp.transpose(b2)                            # (H, 1)
    w3t = jnp.transpose(w3).astype(compute_dtype)      # (Dout,H) bf16 MXU operand
    b3t = jnp.transpose(b3)                            # (Dout,1)

    full = lambda shape: pl.BlockSpec(shape, lambda i: (0, 0))

    out_t = pl.pallas_call(
        _mlp_kernel,
        out_shape=jax.ShapeDtypeStruct((Dout, Bp), x.dtype),
        grid=(num_batch_tiles,),
        in_specs=[
            pl.BlockSpec((Din, TB), lambda i: (0, i)),  # x tile, batch on lanes
            full((H, Din)), full((H, 1)),               # layer 1 (f32, VPU)
            full((H, H)),   full((H, 1)),               # layer 2 (bf16 MXU)
            full((Dout, H)), full((Dout, 1)),           # layer 3 (bf16 MXU)
        ],
        out_specs=pl.BlockSpec((Dout, TB), lambda i: (0, i)),
        compiler_params=pltpu.CompilerParams(
            dimension_semantics=("parallel",)
        ),
    )(xt, w1t, b1t, w2t, b2t, w3t, b3t)

    return jnp.transpose(out_t[:, :B])                 # (B, Dout)


# ----------------------------------------------------------------------------
# Parameter construction: BaseModel.initialise_weights semantics
#   nn.Linear -> xavier_uniform_ weight, zeros_ bias
# ----------------------------------------------------------------------------
def xavier_uniform(key, fan_in, fan_out, dtype=jnp.float32):
    bound = math.sqrt(6.0 / (fan_in + fan_out))
    # weight stored as (fan_in, fan_out) so the math is x @ W
    return jax.random.uniform(
        key, (fan_in, fan_out), dtype=dtype, minval=-bound, maxval=bound
    )


def init_params(key, in_dim, hidden, out_dim):
    k1, k2, k3 = jax.random.split(key, 3)
    w1 = xavier_uniform(k1, in_dim, hidden)
    b1 = jnp.zeros((1, hidden), jnp.float32)
    w2 = xavier_uniform(k2, hidden, hidden)
    b2 = jnp.zeros((1, hidden), jnp.float32)
    w3 = xavier_uniform(k3, hidden, out_dim)
    b3 = jnp.zeros((1, out_dim), jnp.float32)
    return (w1, b1, w2, b2, w3, b3)


def mlp_reference(x, params, compute_dtype=jnp.bfloat16):
    """Pure-JAX reference mirroring the kernel's numerics (f32 layer 1,
    bf16-operand / f32-accumulate layers 2 & 3)."""
    w1, b1, w2, b2, w3, b3 = params
    din = x.shape[1]
    pre1 = x[:, 0:1] * w1[0:1, :]
    for k in range(1, din):
        pre1 = pre1 + x[:, k : k + 1] * w1[k : k + 1, :]
    h1 = jnp.tanh(pre1 + b1)
    h2 = jnp.tanh(
        jnp.dot(h1.astype(compute_dtype), w2.astype(compute_dtype),
                preferred_element_type=jnp.float32) + b2
    )
    return (
        jnp.dot(h2.astype(compute_dtype), w3.astype(compute_dtype),
                preferred_element_type=jnp.float32) + b3
    )


# ----------------------------------------------------------------------------
if __name__ == "__main__":
    key = jax.random.PRNGKey(0)
    k_x, k_p = jax.random.split(key)

    # Small PINN-style shapes: batch of 2-D collocation points -> scalar field.
    batch, in_dim, hidden, out_dim = 256, 2, 32, 1
    x = jax.random.normal(k_x, (batch, in_dim), dtype=jnp.float32)
    params = init_params(k_p, in_dim, hidden, out_dim)

    out = mlp_forward(x, params)
    out = jax.block_until_ready(out)
    ref = mlp_reference(x, params)
    assert out.shape == (batch, out_dim)
    assert jnp.allclose(out, ref, atol=1e-4, rtol=1e-4), "mismatch vs reference"

    # Non-multiple-of-128 batch exercises the cdiv / padding path.
    x2 = jax.random.normal(k_x, (200, in_dim), dtype=jnp.float32)
    out2 = jax.block_until_ready(mlp_forward(x2, params))
    ref2 = mlp_reference(x2, params)
    assert out2.shape == (200, out_dim)
    assert jnp.allclose(out2, ref2, atol=1e-4, rtol=1e-4), "mismatch (padded batch)"

    print("KERNEL_OK")
</pallas_src>

<mosaic_0001>
module attributes {stable_mosaic.version = 11 : i64} {
  func.func @_mlp_kernel(%arg0: i32, %arg1: memref<2x256xf32, #tpu.memory_space<vmem>>, %arg2: memref<32x2xf32, #tpu.memory_space<vmem>>, %arg3: memref<32x1xf32, #tpu.memory_space<vmem>>, %arg4: memref<32x32xbf16, #tpu.memory_space<vmem>>, %arg5: memref<32x1xf32, #tpu.memory_space<vmem>>, %arg6: memref<1x32xbf16, #tpu.memory_space<vmem>>, %arg7: memref<1x1xf32, #tpu.memory_space<vmem>>, %arg8: memref<1x256xf32, #tpu.memory_space<vmem>>) attributes {dimension_semantics = [#tpu.dimension_semantics<parallel>], iteration_bounds = array<i64: 1>, scalar_prefetch = 0 : i64, scratch_operands = 0 : i64, tpu.core_type = #tpu.core_type<tc>, window_params = [{transform_indices = @transform_0, window_bounds = array<i64: 2, 256>}, {pipeline_mode = #tpu.pipeline_mode<synchronous>, transform_indices = @transform_1, window_bounds = array<i64: 32, 2>}, {pipeline_mode = #tpu.pipeline_mode<synchronous>, transform_indices = @transform_2, window_bounds = array<i64: 32, 1>}, {pipeline_mode = #tpu.pipeline_mode<synchronous>, transform_indices = @transform_3, window_bounds = array<i64: 32, 32>}, {pipeline_mode = #tpu.pipeline_mode<synchronous>, transform_indices = @transform_4, window_bounds = array<i64: 32, 1>}, {pipeline_mode = #tpu.pipeline_mode<synchronous>, transform_indices = @transform_5, window_bounds = array<i64: 1, 32>}, {pipeline_mode = #tpu.pipeline_mode<synchronous>, transform_indices = @transform_6, window_bounds = array<i64: 1, 1>}, {transform_indices = @transform_7, window_bounds = array<i64: 1, 256>}]} {
    %c0 = arith.constant 0 : index
    %c0_0 = arith.constant 0 : index
    %0 = vector.load %arg1[%c0, %c0_0] : memref<2x256xf32, #tpu.memory_space<vmem>>, vector<2x256xf32>
    %c0_1 = arith.constant 0 : index
    %c0_2 = arith.constant 0 : index
    %1 = vector.load %arg2[%c0_1, %c0_2] : memref<32x2xf32, #tpu.memory_space<vmem>>, vector<32x2xf32>
    %2 = vector.extract_strided_slice %1 {offsets = [0, 0], sizes = [32, 1], strides = [1, 1]} : vector<32x2xf32> to vector<32x1xf32>
    %3 = vector.extract_strided_slice %0 {offsets = [0, 0], sizes = [1, 256], strides = [1, 1]} : vector<2x256xf32> to vector<1x256xf32>
    %4 = vector.broadcast %2 : vector<32x1xf32> to vector<32x256xf32>
    %5 = vector.broadcast %3 : vector<1x256xf32> to vector<32x256xf32>
    %6 = arith.mulf %4, %5 : vector<32x256xf32>
    %7 = vector.extract_strided_slice %1 {offsets = [0, 1], sizes = [32, 1], strides = [1, 1]} : vector<32x2xf32> to vector<32x1xf32>
    %8 = vector.extract_strided_slice %0 {offsets = [1, 0], sizes = [1, 256], strides = [1, 1]} : vector<2x256xf32> to vector<1x256xf32>
    %9 = vector.broadcast %7 : vector<32x1xf32> to vector<32x256xf32>
    %10 = vector.broadcast %8 : vector<1x256xf32> to vector<32x256xf32>
    %11 = arith.mulf %9, %10 : vector<32x256xf32>
    %12 = arith.addf %6, %11 : vector<32x256xf32>
    %c0_3 = arith.constant 0 : index
    %c0_4 = arith.constant 0 : index
    %13 = vector.load %arg3[%c0_3, %c0_4] : memref<32x1xf32, #tpu.memory_space<vmem>>, vector<32x1xf32>
    %14 = vector.broadcast %13 : vector<32x1xf32> to vector<32x256xf32>
    %15 = arith.addf %12, %14 : vector<32x256xf32>
    %16 = math.tanh %15 : vector<32x256xf32>
    %c0_5 = arith.constant 0 : index
    %c0_6 = arith.constant 0 : index
    %17 = vector.load %arg4[%c0_5, %c0_6] : memref<32x32xbf16, #tpu.memory_space<vmem>>, vector<32x32xbf16>
    %18 = arith.truncf %16 : vector<32x256xf32> to vector<32x256xbf16>
    %cst = arith.constant dense<0.000000e+00> : vector<32x256xf32>
    %19 = tpu.matmul %17, %18, %cst {dimension_numbers = #tpu.dot_dimension_numbers<[1], [0], [0], [1], [0, 0, 1, 1], [], []>} : vector<32x32xbf16>, vector<32x256xbf16>, vector<32x256xf32> -> vector<32x256xf32>
    %c0_7 = arith.constant 0 : index
    %c0_8 = arith.constant 0 : index
    %20 = vector.load %arg5[%c0_7, %c0_8] : memref<32x1xf32, #tpu.memory_space<vmem>>, vector<32x1xf32>
    %21 = vector.broadcast %20 : vector<32x1xf32> to vector<32x256xf32>
    %22 = arith.addf %19, %21 : vector<32x256xf32>
    %23 = math.tanh %22 : vector<32x256xf32>
    %c0_9 = arith.constant 0 : index
    %c0_10 = arith.constant 0 : index
    %24 = vector.load %arg6[%c0_9, %c0_10] : memref<1x32xbf16, #tpu.memory_space<vmem>>, vector<1x32xbf16>
    %25 = arith.truncf %23 : vector<32x256xf32> to vector<32x256xbf16>
    %cst_11 = arith.constant dense<0.000000e+00> : vector<1x256xf32>
    %26 = tpu.matmul %24, %25, %cst_11 {dimension_numbers = #tpu.dot_dimension_numbers<[1], [0], [0], [1], [0, 0, 1, 1], [], []>} : vector<1x32xbf16>, vector<32x256xbf16>, vector<1x256xf32> -> vector<1x256xf32>
    %c0_12 = arith.constant 0 : index
    %c0_13 = arith.constant 0 : index
    %27 = vector.load %arg7[%c0_12, %c0_13] : memref<1x1xf32, #tpu.memory_space<vmem>>, vector<1x1xf32>
    %28 = vector.broadcast %27 : vector<1x1xf32> to vector<1x256xf32>
    %29 = arith.addf %26, %28 : vector<1x256xf32>
    %c0_14 = arith.constant 0 : index
    %c0_15 = arith.constant 0 : index
    %30 = vector.load %arg8[%c0_14, %c0_15] : memref<1x256xf32, #tpu.memory_space<vmem>>, vector<1x256xf32>
    tpu.vector_store %arg8[%c0_14, %c0_15], %29 {strides = array<i32>} : memref<1x256xf32, #tpu.memory_space<vmem>>, vector<1x256xf32>,
    return
  }
  func.func @transform_0(%arg0: i32) -> (i32, i32) {
    %c0_i32 = arith.constant 0 : i32
    %c0_i32_0 = arith.constant 0 : i32
    return %c0_i32, %arg0 : i32, i32
  }
  func.func @transform_1(%arg0: i32) -> (i32, i32) {
    %c0_i32 = arith.constant 0 : i32
    %c0_i32_0 = arith.constant 0 : i32
    %c0_i32_1 = arith.constant 0 : i32
    return %c0_i32, %c0_i32_0 : i32, i32
  }
  func.func @transform_2(%arg0: i32) -> (i32, i32) {
    %c0_i32 = arith.constant 0 : i32
    %c0_i32_0 = arith.constant 0 : i32
    %c0_i32_1 = arith.constant 0 : i32
    return %c0_i32, %c0_i32_0 : i32, i32
  }
  func.func @transform_3(%arg0: i32) -> (i32, i32) {
    %c0_i32 = arith.constant 0 : i32
    %c0_i32_0 = arith.constant 0 : i32
    %c0_i32_1 = arith.constant 0 : i32
    return %c0_i32, %c0_i32_0 : i32, i32
  }
  func.func @transform_4(%arg0: i32) -> (i32, i32) {
    %c0_i32 = arith.constant 0 : i32
    %c0_i32_0 = arith.constant 0 : i32
    %c0_i32_1 = arith.constant 0 : i32
    return %c0_i32, %c0_i32_0 : i32, i32
  }
  func.func @transform_5(%arg0: i32) -> (i32, i32) {
    %c0_i32 = arith.constant 0 : i32
    %c0_i32_0 = arith.constant 0 : i32
    %c0_i32_1 = arith.constant 0 : i32
    return %c0_i32, %c0_i32_0 : i32, i32
  }
  func.func @transform_6(%arg0: i32) -> (i32, i32) {
    %c0_i32 = arith.constant 0 : i32
    %c0_i32_0 = arith.constant 0 : i32
    %c0_i32_1 = arith.constant 0 : i32
    return %c0_i32, %c0_i32_0 : i32, i32
  }
  func.func @transform_7(%arg0: i32) -> (i32, i32) {
    %c0_i32 = arith.constant 0 : i32
    %c0_i32_0 = arith.constant 0 : i32
    return %c0_i32, %arg0 : i32, i32
  }
}

</mosaic_0001>

<llo_original>
// kernel: tpu_custom_call.1
$region0: #{tpu_custom_call.1}
  #allocation0 [shape = 'u32[]', space=smem, size = 0x4, offset = 0x4, fixed_abs, tag = 'smem constant byte address 0x4 - core index']
  #allocation1 [shape = 'u32[144,128]{1,0:T(1,128)}', space=vmem, size = 0x12000, scoped, tag = 'internal scratch']
  #allocation2 [shape = 'f32[1,1]{1,0:T(1,128)S(1)}', space=vmem, size = 0x200, scoped, tag = 'scoped memory for tpu_custom_call.1']
  %s0 = inlined_call_operand.vmem [shape: f32[2,256], index: 0, kind: input, shape index: {}]
  %s1 = inlined_call_operand.vmem [shape: f32[32,2], index: 1, kind: input, shape index: {}]
  %s2 = inlined_call_operand.vmem [shape: f32[32,1], index: 2, kind: input, shape index: {}]
  %s3 = inlined_call_operand.vmem [shape: bf16[32,32], index: 3, kind: input, shape index: {}]
  %s4 = inlined_call_operand.vmem [shape: f32[32,1], index: 4, kind: input, shape index: {}]
  %s5 = inlined_call_operand.vmem [shape: bf16[1,32], index: 5, kind: input, shape index: {}]
  %s6 = inlined_call_operand.<no memory space> [shape: f32[1,1], index: 6, kind: input, shape index: {}]
  %s7 = inlined_call_operand.hbm [shape: f32[1,256], index: 7, kind: output, shape index: {}]
  %s8 = sld [smem:[#allocation0]]
  $region38: #{tpu_custom_call.1} parent=0
    _
  %s10 = ssub.s32 1, %s8
  %s11 = scalar_select 0, %s10, %s8
  %v12 = vstv %s6
  %13 = vst [vmem:[#allocation2] sm:$0x1] %v12
  $region1: #{tpu_custom_call.1} parent=0
    #allocation3 [shape = 'u8[1024]{0}', space=vmem, size = 0x400, scoped, tag = 'output window, operand 0, single buffered']
    #allocation4 [shape = 's32[1]{0}', space=sflag, size = 0x4, scoped, tag = 'scoped memory for tpu_custom_call.1']
    %14 = vsyncpa [#allocation4], 0
    // Predicated region
    $region2: #{tpu_custom_call.1} parent=1 // pred_check
      _
    $region3: #{tpu_custom_call.1} parent=1 // pred_check_branch
      %16 = sbr.rel (0) target = $region5
    $region4: #{tpu_custom_call.1} parent=1 // pred_region
      _
    $region5: #{tpu_custom_call.1} parent=1 // pred_fallthru
      _
    // Predicated region
    $region6: #{tpu_custom_call.1} parent=1 // pred_check
      _
    $region7: #{tpu_custom_call.1} parent=1 // pred_check_branch
      %18 = sbr.rel (0) target = $region9
    $region8: #{tpu_custom_call.1} parent=1 // pred_region
      _
    $region9: #{tpu_custom_call.1} parent=1 // pred_fallthru
      _
    // Predicated region
    $region10: #{tpu_custom_call.1} parent=1 // pred_check
      _
    $region11: #{tpu_custom_call.1} parent=1 // pred_check_branch
      %20 = sbr.rel (0) target = $region13
    $region12: #{tpu_custom_call.1} parent=1 // pred_region
      _
    $region13: #{tpu_custom_call.1} parent=1 // pred_fallthru
      _
    // Predicated region
    $region14: #{tpu_custom_call.1} parent=1 // pred_check
      _
    $region15: #{tpu_custom_call.1} parent=1 // pred_check_branch
      %22 = sbr.rel (0) target = $region17
    $region16: #{tpu_custom_call.1} parent=1 // pred_region
      _
    $region17: #{tpu_custom_call.1} parent=1 // pred_fallthru
      _
    // Predicated region
    $region18: #{tpu_custom_call.1} parent=1 // pred_check
      _
    $region19: #{tpu_custom_call.1} parent=1 // pred_check_branch
      %24 = sbr.rel (0) target = $region21
    $region20: #{tpu_custom_call.1} parent=1 // pred_region
      _
    $region21: #{tpu_custom_call.1} parent=1 // pred_fallthru
      _
    // Predicated region
    $region22: #{tpu_custom_call.1} parent=1 // pred_check
      _
    $region23: #{tpu_custom_call.1} parent=1 // pred_check_branch
      %26 = sbr.rel (0) target = $region25
    $region24: #{tpu_custom_call.1} parent=1 // pred_region
      _
    $region25: #{tpu_custom_call.1} parent=1 // pred_fallthru
      _
    // Predicated region
    $region26: #{tpu_custom_call.1} parent=1 // pred_check
      _
    $region27: #{tpu_custom_call.1} parent=1 // pred_check_branch
      %28 = sbr.rel (0) target = $region29
    $region28: #{tpu_custom_call.1} parent=1 // pred_region
      _
    $region29: #{tpu_custom_call.1} parent=1 // pred_fallthru
      _
    %v30 = vld [vmem:[%s0] sm:$0xf]
    %v31 = vld [vmem:[%s1] sm:$0xff]
    %v32 = vld [vmem:[%s1 + $0x8] sm:$0xff]
    %v33 = vld [vmem:[%s1 + $0x10] sm:$0xff]
    %v34 = vld [vmem:[%s1 + $0x18] sm:$0xff]
    %36 = vset.pattern.permute.xlu0 0
    %37 = vperm.xlu0 %36, %v31
    %v38 = vpop.permute.xlu0 %37
    %41 = vset.pattern.permute.xlu0 0
    %42 = vperm.xlu0 %41, %v32
    %v43 = vpop.permute.xlu0 %42
    %46 = vset.pattern.permute.xlu0 0
    %47 = vperm.xlu0 %46, %v33
    %v48 = vpop.permute.xlu0 %47
    %51 = vset.pattern.permute.xlu0 0
    %52 = vperm.xlu0 %51, %v34
    %v53 = vpop.permute.xlu0 %52
    %v56 = vlaneseq
    %v57 = vshrl.u32 %v56, 7
    %v58 = vsub.s32 0, %v57
    %v59 = vrot.slane %v30, %v58
    %v60 = vlaneseq
    %v61 = vshrl.u32 %v60, 7
    %v62 = vsub.s32 2, %v61
    %v63 = vrot.slane %v30, %v62
    %v66 = vlaneseq
    %v67 = vshrl.u32 %v66, 7
    %v68 = vsub.s32 0, %v67
    %v69 = vrot.slane %v59, %v68
    %v70 = vlaneseq
    %v71 = vshrl.u32 %v70, 7
    %v72 = vsub.s32 0, %v71
    %v73 = vrot.slane %v63, %v72
    %v74 = vmul.f32 %v38, %v69
    %v75 = vmul.f32 %v38, %v73
    %v76 = vmul.f32 %v43, %v69
    %v77 = vmul.f32 %v43, %v73
    %v78 = vmul.f32 %v48, %v69
    %v79 = vmul.f32 %v48, %v73
    %v80 = vmul.f32 %v53, %v69
    %v81 = vmul.f32 %v53, %v73
    %82 = vset.pattern.permute.xlu0 1
    %83 = vperm.xlu0 %82, %v31
    %v84 = vpop.permute.xlu0 %83
    %86 = vset.pattern.permute.xlu0 1
    %87 = vperm.xlu0 %86, %v32
    %v88 = vpop.permute.xlu0 %87
    %90 = vset.pattern.permute.xlu0 1
    %91 = vperm.xlu0 %90, %v33
    %v92 = vpop.permute.xlu0 %91
    %94 = vset.pattern.permute.xlu0 1
    %95 = vperm.xlu0 %94, %v34
    %v96 = vpop.permute.xlu0 %95
    %v98 = vlaneseq
    %v99 = vshrl.u32 %v98, 7
    %v100 = vsub.s32 1, %v99
    %v101 = vrot.slane %v30, %v100
    %v102 = vlaneseq
    %v103 = vshrl.u32 %v102, 7
    %v104 = vsub.s32 3, %v103
    %v105 = vrot.slane %v30, %v104
    %v108 = vlaneseq
    %v109 = vshrl.u32 %v108, 7
    %v110 = vsub.s32 1, %v109
    %v111 = vrot.slane %v101, %v110
    %v112 = vlaneseq
    %v113 = vshrl.u32 %v112, 7
    %v114 = vsub.s32 1, %v113
    %v115 = vrot.slane %v105, %v114
    %v116 = vmul.f32 %v84, %v111
    %v117 = vmul.f32 %v84, %v115
    %v118 = vmul.f32 %v88, %v111
    %v119 = vmul.f32 %v88, %v115
    %v120 = vmul.f32 %v92, %v111
    %v121 = vmul.f32 %v92, %v115
    %v122 = vmul.f32 %v96, %v111
    %v123 = vmul.f32 %v96, %v115
    %v124 = vadd.f32 %v74, %v116
    %v125 = vadd.f32 %v75, %v117
    %v126 = vadd.f32 %v76, %v118
    %v127 = vadd.f32 %v77, %v119
    %v128 = vadd.f32 %v78, %v120
    %v129 = vadd.f32 %v79, %v121
    %v130 = vadd.f32 %v80, %v122
    %v131 = vadd.f32 %v81, %v123
    %v132 = vld [vmem:[%s2] sm:$0xff]
    %v133 = vld [vmem:[%s2 + $0x8] sm:$0xff]
    %v134 = vld [vmem:[%s2 + $0x10] sm:$0xff]
    %v135 = vld [vmem:[%s2 + $0x18] sm:$0xff]
    %137 = vset.pattern.permute.xlu0 0
    %138 = vperm.xlu0 %137, %v132
    %v139 = vpop.permute.xlu0 %138
    %142 = vset.pattern.permute.xlu0 0
    %143 = vperm.xlu0 %142, %v133
    %v144 = vpop.permute.xlu0 %143
    %147 = vset.pattern.permute.xlu0 0
    %148 = vperm.xlu0 %147, %v134
    %v149 = vpop.permute.xlu0 %148
    %152 = vset.pattern.permute.xlu0 0
    %153 = vperm.xlu0 %152, %v135
    %v154 = vpop.permute.xlu0 %153
    %v156 = vadd.f32 %v124, %v139
    %v157 = vadd.f32 %v125, %v139
    %v158 = vadd.f32 %v126, %v144
    %v159 = vadd.f32 %v127, %v144
    %v160 = vadd.f32 %v128, %v149
    %v161 = vadd.f32 %v129, %v149
    %v162 = vadd.f32 %v130, %v154
    %v163 = vadd.f32 %v131, %v154
    %v164 = vtanh.pop %v156
    %v165 = vtanh.pop %v157
    %v166 = vtanh.pop %v158
    %v167 = vtanh.pop %v159
    %v168 = vtanh.pop %v160
    %v169 = vtanh.pop %v161
    %v170 = vtanh.pop %v162
    %v171 = vtanh.pop %v163
    %v172 = vld [vmem:[%s3] sm:$0xf]
    %v173 = vld [vmem:[%s3 + $0x4] sm:$0xf]
    %v174 = vld [vmem:[%s3 + $0x8] sm:$0xf]
    %v175 = vld [vmem:[%s3 + $0xc] sm:$0xf]
    %v176 = vpack.c.bf16 %v166, %v164
    %v177 = vpack.c.bf16 %v167, %v165
    %v178 = vpack.c.bf16 %v170, %v168
    %v179 = vpack.c.bf16 %v171, %v169
    %v180 = vld [vmem:[%s4] sm:$0xff]
    %v181 = vld [vmem:[%s4 + $0x8] sm:$0xff]
    %v182 = vld [vmem:[%s4 + $0x10] sm:$0xff]
    %v183 = vld [vmem:[%s4 + $0x18] sm:$0xff]
    %185 = vset.pattern.permute.xlu0 0
    %186 = vperm.xlu0 %185, %v180
    %v187 = vpop.permute.xlu0 %186
    %190 = vset.pattern.permute.xlu0 0
    %191 = vperm.xlu0 %190, %v181
    %v192 = vpop.permute.xlu0 %191
    %195 = vset.pattern.permute.xlu0 0
    %196 = vperm.xlu0 %195, %v182
    %v197 = vpop.permute.xlu0 %196
    %200 = vset.pattern.permute.xlu0 0
    %201 = vperm.xlu0 %200, %v183
    %v202 = vpop.permute.xlu0 %201
    %v208 = vunpack.c.l.b16 %v172
    %v209 = vunpack.c.l.b16 %v173
    %v210 = vunpack.c.l.b16 %v174
    %v211 = vunpack.c.l.b16 %v175
    %v212 = vpack.c.b16 %v209, %v208
    %v213 = vpack.c.b16 %v211, %v210
    %vm214 = vcmask 261120
    %v216 = vsel %vm214, %v212, 0
    %v219 = vsel %vm214, %v213, 0
    %221 = vmatprep.subr.bf16.mxu0 %v177
    %222 = vmatpush1.bf16.msra.mxu0 %v176
    %223 = vmatprep.subr.bf16.mxu0 %v179
    %224 = vmatpush1.bf16.msra.mxu0 %v178
    %225 = vmatprep.subr.bf16.mxu0 0
    %226 = vmatpush1.bf16.msra.mxu0 0
    %227 = vmatprep.subr.bf16.mxu0 0
    %228 = vmatpush1.bf16.msra.mxu0 0
    %229 = vmatprep.subr.bf16.mxu0 0
    %230 = vmatpush1.bf16.msra.mxu0 0
    %231 = vmatprep.subr.bf16.mxu0 0
    %232 = vmatpush1.bf16.msra.mxu0 0
    %233 = vmatprep.subr.bf16.mxu0 0
    %234 = vmatpush1.bf16.msra.mxu0 0
    %235 = vmatprep.subr.bf16.mxu0 0
    %236 = vmatpush1.bf16.msra.mxu0 0
    %237 = vmatprep.subr.bf16.mxu0 0
    %238 = vmatpush1.bf16.msra.mxu0 0
    %239 = vmatprep.subr.bf16.mxu0 0
    %240 = vmatpush1.bf16.msra.mxu0 0
    %241 = vmatprep.subr.bf16.mxu0 0
    %242 = vmatpush1.bf16.msra.mxu0 0
    %243 = vmatprep.subr.bf16.mxu0 0
    %244 = vmatpush1.bf16.msra.mxu0 0
    %245 = vmatprep.subr.bf16.mxu0 0
    %246 = vmatpush1.bf16.msra.mxu0 0
    %247 = vmatprep.subr.bf16.mxu0 0
    %248 = vmatpush1.bf16.msra.mxu0 0
    %249 = vmatprep.subr.bf16.mxu0 0
    %250 = vmatpush1.bf16.msra.mxu0 0
    %251 = vmatprep.subr.bf16.mxu0 0
    %252 = vmatpush1.bf16.msra.mxu0 0
    %253 = vmatprep.mubr.bf16.mxu0 0
    %254 = vmatmul.mubr.bf16.gmra.mrb[0].mxu0 %v216
    %v255 = vpop.f32.mrb[0].mxu0
    %v256 = vadd.f32 %v187, %v255
    %v257 = vpop.f32.mrb[0].mxu0
    %v258 = vadd.f32 %v187, %v257
    %v259 = vpop.f32.mrb[0].mxu0
    %v260 = vadd.f32 %v192, %v259
    %v261 = vpop.f32.mrb[0].mxu0
    %v262 = vadd.f32 %v192, %v261
    %263 = vmatprep.mubr.bf16.mxu0 0
    %264 = vmatmul.mubr.bf16.gmra.mrb[0].mxu0 %v219
    %v265 = vpop.f32.mrb[0].mxu0
    %v266 = vadd.f32 %v197, %v265
    %v267 = vpop.f32.mrb[0].mxu0
    %v268 = vadd.f32 %v197, %v267
    %v269 = vpop.f32.mrb[0].mxu0
    %v270 = vadd.f32 %v202, %v269
    %v271 = vpop.f32.mrb[0].mxu0
    %v272 = vadd.f32 %v202, %v271
    %273 = vdwg.mxu0
    %v274 = vtanh.pop %v256
    %v275 = vtanh.pop %v258
    %v276 = vtanh.pop %v260
    %v277 = vtanh.pop %v262
    %v278 = vtanh.pop %v266
    %v279 = vtanh.pop %v268
    %v280 = vtanh.pop %v270
    %v281 = vtanh.pop %v272
    %v282 = vld [vmem:[%s5] sm:$0x1]
    %v283 = vpack.c.bf16 %v276, %v274
    %v284 = vpack.c.bf16 %v277, %v275
    %v285 = vpack.c.bf16 %v280, %v278
    %v286 = vpack.c.bf16 %v281, %v279
    %v287 = vld [vmem:[#allocation2] sm:$0x1]
    %289 = vset.pattern.permute.xlu0 0
    %290 = vperm.xlu0 %289, %v287
    %v291 = vpop.permute.xlu0 %290
    %v293 = vlaneseq
    %v294 = vshrl.u32 %v293, 7
    %v295 = vsub.s32 0, %v294
    %v296 = vrot.slane %v291, %v295
    %v298 = vsel %vm214, %v282, 0
    %300 = vmatprep.subr.bf16.mxu0 %v284
    %301 = vmatpush1.bf16.msra.mxu0 %v283
    %302 = vmatprep.subr.bf16.mxu0 %v286
    %303 = vmatpush1.bf16.msra.mxu0 %v285
    %304 = vmatprep.subr.bf16.mxu0 0
    %305 = vmatpush1.bf16.msra.mxu0 0
    %306 = vmatprep.subr.bf16.mxu0 0
    %307 = vmatpush1.bf16.msra.mxu0 0
    %308 = vmatprep.subr.bf16.mxu0 0
    %309 = vmatpush1.bf16.msra.mxu0 0
    %310 = vmatprep.subr.bf16.mxu0 0
    %311 = vmatpush1.bf16.msra.mxu0 0
    %312 = vmatprep.subr.bf16.mxu0 0
    %313 = vmatpush1.bf16.msra.mxu0 0
    %314 = vmatprep.subr.bf16.mxu0 0
    %315 = vmatpush1.bf16.msra.mxu0 0
    %316 = vmatprep.subr.bf16.mxu0 0
    %317 = vmatpush1.bf16.msra.mxu0 0
    %318 = vmatprep.subr.bf16.mxu0 0
    %319 = vmatpush1.bf16.msra.mxu0 0
    %320 = vmatprep.subr.bf16.mxu0 0
    %321 = vmatpush1.bf16.msra.mxu0 0
    %322 = vmatprep.subr.bf16.mxu0 0
    %323 = vmatpush1.bf16.msra.mxu0 0
    %324 = vmatprep.subr.bf16.mxu0 0
    %325 = vmatpush1.bf16.msra.mxu0 0
    %326 = vmatprep.subr.bf16.mxu0 0
    %327 = vmatpush1.bf16.msra.mxu0 0
    %328 = vmatprep.subr.bf16.mxu0 0
    %329 = vmatpush1.bf16.msra.mxu0 0
    %330 = vmatprep.subr.bf16.mxu0 0
    %331 = vmatpush1.bf16.msra.mxu0 0
    %332 = vmatprep.mubr.bf16.mxu0 0
    %333 = vmatmul.mubr.bf16.gmra.mrb[0].mxu0 %v298
    %v334 = vpop.f32.mrb[0].mxu0
    %v335 = vadd.f32 %v296, %v334
    %v336 = vpop.f32.mrb[0].mxu0
    %v337 = vadd.f32 %v296, %v336
    %v338 = vpop.f32.mrb[0].mxu0
    %v339 = vpop.f32.mrb[0].mxu0
    %340 = vdwg.mxu0
    %v343 = vcombine.low %v335, %v337
    %v345 = vunpack.c.l.s4 1966171168
    %v346 = vunpack.c.0.s8 %v345
    %v347 = vlaneseq
    %v348 = vshrl.u32 %v347, 7
    %v349 = vsub.s32 %v346, %v348
    %v350 = vrot.slane %v343, %v349
    %v352 = vunpack.c.l.s4 1966171168
    %v353 = vunpack.c.0.s8 %v352
    %v354 = vlaneseq
    %v355 = vshrl.u32 %v354, 7
    %v356 = vsub.s32 %v353, %v355
    %v357 = vrot.slane %v350, %v356
    %v359 = vlaneseq
    %vm360 = vcmp.ge.s32.totalorder %v359, 0
    %vm361 = vcmp.lt.s32.totalorder %v359, 256
    %vm362 = vmand %vm360, %vm361
    %363 = vst.msk [vmem:[#allocation3] sm:$0x3] %vm362, %v357
    // Predicated region
    $region30: #{tpu_custom_call.1} parent=1 // pred_check
      _
    $region31: #{tpu_custom_call.1} parent=1 // pred_check_branch
      %365 = sbr.rel (0) target = $region33
    $region32: #{tpu_custom_call.1} parent=1 // pred_region
      %s367 = ssub.s32 32, 32
      %368 = vsyncadd [#allocation4], %s367
      %s370 = sshll.u32 [#allocation3], 4
      %s371 = int_to_ptr.vmem [resolvable:$true] %s370
      %373 = dma.vmem_to_hbm [thread:$0]  %s371, 32, %s7, [#allocation4]
    $region33: #{tpu_custom_call.1} parent=1 // pred_fallthru
      _
    // Predicated region
    $region34: #{tpu_custom_call.1} parent=1 // pred_check
      _
    $region35: #{tpu_custom_call.1} parent=1 // pred_check_branch
      %375 = sbr.rel (0) target = $region37
    $region36: #{tpu_custom_call.1} parent=1 // pred_region
      %376 = dma.done [#allocation4], 32
    $region37: #{tpu_custom_call.1} parent=1 // pred_fallthru
      _
    %377 = vsyncpa [#allocation4], 1

</llo_original>
